<compile_context>
chip_gen: v5e
topology: v5e:2x2
jax: 0.10.0
libtpu: 0.0.40
codegen_flags: <defaults>
</compile_context>

<pallas_src>
import functools
import math

import jax
import jax.numpy as jnp
from jax import lax
from jax.experimental import pallas as pl
from jax.experimental.pallas import tpu as pltpu

LN_EPS = 1e-5  # torch.nn.LayerNorm default


def _exact_gelu(x):
    # torch.nn.GELU() default is the exact (erf-based) GELU.
    return 0.5 * x * (1.0 + lax.erf(x * (1.0 / math.sqrt(2.0))))


def mixer_block_kernel(x_ref,
                       ln2_g_ref, ln2_b_ref, tw1_ref, tb1_ref, tw2_ref, tb2_ref,
                       ln1_g_ref, ln1_b_ref, cw1_ref, cb1_ref, cw2_ref, cb2_ref,
                       o_ref, mid_ref, *, compute_dtype, hc_chunk):
    """Fused MixerBlock for a block of Bb batch elements.

    x_ref : (Bb, T, D)  activation slab (D stays on the lane axis throughout)
    token-mix params:   ln2_g/b (T,1), tw1 (Ht,T), tb1 (Ht,1), tw2 (T,Ht), tb2 (T,1)
    channel-mix params: ln1_g/b (1,D), cw1 (D,Hc), cb1 (1,Hc), cw2 (Hc,D), cb2 (1,D)
    o_ref : (Bb, T, D); mid_ref: VMEM f32 scratch (Bb, T, D)
    """
    Bb, T, D = x_ref.shape
    Hc = cw1_ref.shape[1]

    # ---------------- token mixing ----------------
    # LayerNorm over the token axis T (== last dim after the PyTorch permute),
    # done as a cross-sublane reduce on the whole slab so D stays on lanes.
    x = x_ref[...].astype(jnp.float32)                      # (Bb, T, D)
    mean = jnp.mean(x, axis=1, keepdims=True)               # (Bb, 1, D)
    cen = x - mean
    var = jnp.mean(cen * cen, axis=1, keepdims=True)
    xn = cen * lax.rsqrt(var + LN_EPS)
    xn = xn * ln2_g_ref[...] + ln2_b_ref[...]               # (T,1) -> (1,T,1) bcast

    tw1 = tw1_ref[...]
    tw2 = tw2_ref[...]
    tb1 = tb1_ref[...]
    tb2 = tb2_ref[...]
    for b in range(Bb):                                     # static unroll over block batch
        h = jnp.dot(tw1, xn[b].astype(compute_dtype),
                    preferred_element_type=jnp.float32)     # (Ht, D)
        h = _exact_gelu(h + tb1)                            # bias (Ht,1)
        y = jnp.dot(tw2, h.astype(compute_dtype),
                    preferred_element_type=jnp.float32)     # (T, D)
        mid_ref[b] = x[b] + y + tb2                         # residual (pre-LN input), f32

    # ---------------- channel mixing (flattened over Bb*T rows) ----------------
    xc = mid_ref[...].reshape(Bb * T, D)                    # (Bb*T, D) f32
    mean = jnp.mean(xc, axis=-1, keepdims=True)
    cen = xc - mean
    var = jnp.mean(cen * cen, axis=-1, keepdims=True)
    xn = cen * lax.rsqrt(var + LN_EPS)
    xn = xn * ln1_g_ref[...] + ln1_b_ref[...]               # (1, D) broadcast
    xn_c = xn.astype(compute_dtype)

    y = None
    for c0 in range(0, Hc, hc_chunk):                       # bound the (Bb*T, Hc) temp
        c1 = c0 + hc_chunk
        h = jnp.dot(xn_c, cw1_ref[:, c0:c1],
                    preferred_element_type=jnp.float32) + cb1_ref[:, c0:c1]
        h = _exact_gelu(h)
        part = jnp.dot(h.astype(compute_dtype), cw2_ref[c0:c1, :],
                       preferred_element_type=jnp.float32)
        y = part if y is None else y + part
    y = y + cb2_ref[...]

    o_ref[...] = (xc + y).reshape(Bb, T, D).astype(o_ref.dtype)


def _pick_hc_chunk(Hc):
    """Chunk the channel hidden dim to bound the f32 (Bb*T, Hc) intermediate."""
    if Hc <= 512:
        return Hc
    for c in (512, 384, 256, 128):
        if Hc % c == 0:
            return c
    return Hc


def _pick_bb(B, T, D, itemsize, max_bb=16, target_bytes=2 << 20):
    """Batch elements per grid step: ~2 MiB slab, >=2 grid steps, divides B."""
    slab = max(T * D * itemsize, 1)
    bb = int(max(1, min(max_bb, target_bytes // slab)))
    if B >= 2:
        bb = min(bb, B // 2)   # keep >=2 grid steps so v7x's two TensorCores both run
    bb = max(1, min(bb, B))
    while B % bb:
        bb -= 1
    return bb


def _vmem_limit_bytes(Bb, T, D, Ht, Hc, hc_chunk, w_itemsize, io_itemsize):
    """Explicit VMEM budget: double-buffered I/O slabs + single-copy weights + temps."""
    f32 = 4
    slab_io = Bb * T * D * io_itemsize
    slab_f32 = Bb * T * D * f32
    weights = (Ht * T + T * Ht + D * Hc + Hc * D) * w_itemsize
    small = (4 * T + 4 * D + 2 * Ht + 2 * Hc) * f32
    temps = 4 * slab_f32 + Bb * T * hc_chunk * f32 + Ht * D * f32
    need = (2 * 2 * slab_io            # x in + out, double-buffered
            + weights + small          # Buffered(1) constants: single copy
            + slab_f32                 # mid scratch
            + temps
            + (4 << 20))               # slack for compiler temporaries
    try:
        phys = int(pltpu.get_tpu_info().vmem_capacity_bytes)
    except Exception:
        phys = 64 << 20                # conservative (v7x per-TC) fallback
    cap = max(phys - (8 << 20), 16 << 20)   # leave headroom, never request full physical
    return int(min(max(need, 16 << 20), cap))


def mixer_block_forward(x, params, *, compute_dtype=jnp.float32):
    """x: (B, T, D) -> (B, T, D); inference-mode MixerBlock forward."""
    B, T, D = x.shape
    Ht = params["tok_w1"].shape[0]
    Hc = params["ch_w1"].shape[1]

    # Pre-cast the four weight matrices ONCE in the wrapper (halves weight DMA
    # bytes / VMEM and removes per-grid-step casts). LN params / biases stay f32
    # so element-wise math is f32 on all generations (incl. v5e).
    if compute_dtype == jnp.float32:
        tw1, tw2 = params["tok_w1"], params["tok_w2"]
        cw1, cw2 = params["ch_w1"], params["ch_w2"]
    else:
        tw1 = params["tok_w1"].astype(compute_dtype)
        tw2 = params["tok_w2"].astype(compute_dtype)
        cw1 = params["ch_w1"].astype(compute_dtype)
        cw2 = params["ch_w2"].astype(compute_dtype)

    Bb = _pick_bb(B, T, D, x.dtype.itemsize)
    hc_chunk = _pick_hc_chunk(Hc)
    # TODO(synk): for ragged model dims, pad T/D/Ht/Hc to multiples of 128 in this
    # wrapper (lane-dense stores / full MXU tiles); test shapes here are left as-is.

    kernel = functools.partial(mixer_block_kernel,
                               compute_dtype=compute_dtype, hc_chunk=hc_chunk)
    const = lambda b: (0, 0)                 # weights / LN params: same block every step
    resident = dict(pipeline_mode=pl.Buffered(1))   # constants: single-buffered in VMEM

    return pl.pallas_call(
        kernel,
        out_shape=jax.ShapeDtypeStruct((B, T, D), x.dtype),
        grid_spec=pltpu.PrefetchScalarGridSpec(
            num_scalar_prefetch=0,
            grid=(B // Bb,),
            in_specs=[
                pl.BlockSpec((Bb, T, D), lambda b: (b, 0, 0)),   # x slab
                pl.BlockSpec((T, 1), const, **resident),    # ln2 gamma (token LN)
                pl.BlockSpec((T, 1), const, **resident),    # ln2 beta
                pl.BlockSpec((Ht, T), const, **resident),   # token W1 (out, in)
                pl.BlockSpec((Ht, 1), const, **resident),   # token b1
                pl.BlockSpec((T, Ht), const, **resident),   # token W2 (out, in)
                pl.BlockSpec((T, 1), const, **resident),    # token b2
                pl.BlockSpec((1, D), const, **resident),    # ln1 gamma (channel LN)
                pl.BlockSpec((1, D), const, **resident),    # ln1 beta
                pl.BlockSpec((D, Hc), const, **resident),   # channel W1 (in, out)
                pl.BlockSpec((1, Hc), const, **resident),   # channel b1
                pl.BlockSpec((Hc, D), const, **resident),   # channel W2 (in, out)
                pl.BlockSpec((1, D), const, **resident),    # channel b2
            ],
            out_specs=pl.BlockSpec((Bb, T, D), lambda b: (b, 0, 0)),
            scratch_shapes=[pltpu.VMEM((Bb, T, D), jnp.float32)],   # token-mix residual slab
        ),
        compiler_params=pltpu.CompilerParams(
            dimension_semantics=("parallel",),       # batch blocks shard across TCs (v7x)
            vmem_limit_bytes=_vmem_limit_bytes(
                Bb, T, D, Ht, Hc, hc_chunk,
                jnp.dtype(compute_dtype).itemsize, x.dtype.itemsize),
        ),
    )(x,
      params["ln2_g"], params["ln2_b"], tw1, params["tok_b1"], tw2, params["tok_b2"],
      params["ln1_g"], params["ln1_b"], cw1, params["ch_b1"], cw2, params["ch_b2"])


def init_mixer_block_params(key, dim, mlp_dim, num_tokens, mlp_token_dim):
    """Deterministic synthetic parameters.

    Token-mix weights stored as (out, in) so the kernel computes W @ X with D on
    lanes; channel-mix weights stored as (in, out) for X @ W.
    """
    ks = jax.random.split(key, 4)

    def lin(k, fan_in, w_shape, b_shape):
        bound = 1.0 / math.sqrt(fan_in)
        kw, kb = jax.random.split(k)
        w = jax.random.uniform(kw, w_shape, jnp.float32, -bound, bound)
        b = jax.random.uniform(kb, b_shape, jnp.float32, -bound, bound)
        return w, b

    tok_w1, tok_b1 = lin(ks[0], num_tokens, (mlp_token_dim, num_tokens), (mlp_token_dim, 1))
    tok_w2, tok_b2 = lin(ks[1], mlp_token_dim, (num_tokens, mlp_token_dim), (num_tokens, 1))
    ch_w1, ch_b1 = lin(ks[2], dim, (dim, mlp_dim), (1, mlp_dim))
    ch_w2, ch_b2 = lin(ks[3], mlp_dim, (mlp_dim, dim), (1, dim))

    return dict(
        # LayerNorm(num_tokens) / LayerNorm(dim): gamma=1, beta=0 like torch init.
        ln2_g=jnp.ones((num_tokens, 1), jnp.float32),
        ln2_b=jnp.zeros((num_tokens, 1), jnp.float32),
        ln1_g=jnp.ones((1, dim), jnp.float32),
        ln1_b=jnp.zeros((1, dim), jnp.float32),
        tok_w1=tok_w1, tok_b1=tok_b1, tok_w2=tok_w2, tok_b2=tok_b2,
        ch_w1=ch_w1, ch_b1=ch_b1, ch_w2=ch_w2, ch_b2=ch_b2,
    )


def _reference_forward(x, params):
    """Pure-JAX reference (mirrors the PyTorch forward, inference mode)."""
    def ln(v, g, b):
        m = jnp.mean(v, -1, keepdims=True)
        va = jnp.mean((v - m) ** 2, -1, keepdims=True)
        return (v - m) * lax.rsqrt(va + LN_EPS) * g + b

    # token mixing (PyTorch permutes to (B, D, T))
    xp = jnp.transpose(x, (0, 2, 1))
    xn = ln(xp, params["ln2_g"][:, 0], params["ln2_b"][:, 0])
    h = _exact_gelu(jnp.einsum("bdt,ht->bdh", xn, params["tok_w1"]) + params["tok_b1"][:, 0])
    y = jnp.einsum("bdh,th->bdt", h, params["tok_w2"]) + params["tok_b2"][:, 0]
    xp = y + xp
    x = jnp.transpose(xp, (0, 2, 1))

    # channel mixing
    xn = ln(x, params["ln1_g"][0], params["ln1_b"][0])
    h = _exact_gelu(xn @ params["ch_w1"] + params["ch_b1"][0])
    y = h @ params["ch_w2"] + params["ch_b2"][0]
    return y + x


if __name__ == "__main__":
    # Small shapes consistent with MixerBlock(dim, mlp_dim, num_tokens, mlp_token_dim)
    B, T, D = 2, 16, 32          # batch, num_tokens, dim
    MLP_DIM, MLP_TOKEN_DIM = 64, 32

    key = jax.random.PRNGKey(0)
    kx, kp = jax.random.split(key)
    x = jax.random.normal(kx, (B, T, D), jnp.float32)
    params = init_mixer_block_params(kp, D, MLP_DIM, T, MLP_TOKEN_DIM)

    # NOTE: on v6e/v7x, pass compute_dtype=jnp.bfloat16 for peak MXU throughput
    # (weights pre-cast once in the wrapper, f32 accumulation kept); default f32
    # matches the PyTorch/JAX reference within tolerance.
    fwd = jax.jit(mixer_block_forward)
    out = jax.block_until_ready(fwd(x, params))
    ref = jax.block_until_ready(_reference_forward(x, params))

    assert out.shape == (B, T, D)
    assert bool(jnp.allclose(out, ref, atol=1e-3, rtol=1e-3)), "mismatch vs JAX reference"
    print("KERNEL_OK")
</pallas_src>

<mosaic_0001>
module attributes {stable_mosaic.version = 11 : i64} {
  func.func @mixer_block_kernel(%arg0: i32, %arg1: memref<1x16x32xf32, #tpu.memory_space<vmem>>, %arg2: memref<16x1xf32, #tpu.memory_space<vmem>>, %arg3: memref<16x1xf32, #tpu.memory_space<vmem>>, %arg4: memref<32x16xf32, #tpu.memory_space<vmem>>, %arg5: memref<32x1xf32, #tpu.memory_space<vmem>>, %arg6: memref<16x32xf32, #tpu.memory_space<vmem>>, %arg7: memref<16x1xf32, #tpu.memory_space<vmem>>, %arg8: memref<1x32xf32, #tpu.memory_space<vmem>>, %arg9: memref<1x32xf32, #tpu.memory_space<vmem>>, %arg10: memref<32x64xf32, #tpu.memory_space<vmem>>, %arg11: memref<1x64xf32, #tpu.memory_space<vmem>>, %arg12: memref<64x32xf32, #tpu.memory_space<vmem>>, %arg13: memref<1x32xf32, #tpu.memory_space<vmem>>, %arg14: memref<1x16x32xf32, #tpu.memory_space<vmem>>, %arg15: memref<1x16x32xf32, #tpu.memory_space<vmem>>) attributes {dimension_semantics = [#tpu.dimension_semantics<parallel>], iteration_bounds = array<i64: 2>, scalar_prefetch = 0 : i64, scratch_operands = 1 : i64, tpu.core_type = #tpu.core_type<tc>, window_params = [{transform_indices = @transform_0, window_bounds = array<i64: 1, 16, 32>}, {pipeline_mode = #tpu.pipeline_mode<synchronous>, transform_indices = @transform_1, window_bounds = array<i64: 16, 1>}, {pipeline_mode = #tpu.pipeline_mode<synchronous>, transform_indices = @transform_2, window_bounds = array<i64: 16, 1>}, {pipeline_mode = #tpu.pipeline_mode<synchronous>, transform_indices = @transform_3, window_bounds = array<i64: 32, 16>}, {pipeline_mode = #tpu.pipeline_mode<synchronous>, transform_indices = @transform_4, window_bounds = array<i64: 32, 1>}, {pipeline_mode = #tpu.pipeline_mode<synchronous>, transform_indices = @transform_5, window_bounds = array<i64: 16, 32>}, {pipeline_mode = #tpu.pipeline_mode<synchronous>, transform_indices = @transform_6, window_bounds = array<i64: 16, 1>}, {pipeline_mode = #tpu.pipeline_mode<synchronous>, transform_indices = @transform_7, window_bounds = array<i64: 1, 32>}, {pipeline_mode = #tpu.pipeline_mode<synchronous>, transform_indices = @transform_8, window_bounds = array<i64: 1, 32>}, {pipeline_mode = #tpu.pipeline_mode<synchronous>, transform_indices = @transform_9, window_bounds = array<i64: 32, 64>}, {pipeline_mode = #tpu.pipeline_mode<synchronous>, transform_indices = @transform_10, window_bounds = array<i64: 1, 64>}, {pipeline_mode = #tpu.pipeline_mode<synchronous>, transform_indices = @transform_11, window_bounds = array<i64: 64, 32>}, {pipeline_mode = #tpu.pipeline_mode<synchronous>, transform_indices = @transform_12, window_bounds = array<i64: 1, 32>}, {transform_indices = @transform_13, window_bounds = array<i64: 1, 16, 32>}]} {
    %c0 = arith.constant 0 : index
    %c0_0 = arith.constant 0 : index
    %c0_1 = arith.constant 0 : index
    %0 = vector.load %arg1[%c0, %c0_0, %c0_1] : memref<1x16x32xf32, #tpu.memory_space<vmem>>, vector<1x16x32xf32>
    %cst = arith.constant dense<0.000000e+00> : vector<1x32xf32>
    %1 = vector.multi_reduction <add>, %0, %cst [1] : vector<1x16x32xf32> to vector<1x32xf32>
    %2 = vector.shape_cast %1 : vector<1x32xf32> to vector<1x1x32xf32>
    %cst_2 = arith.constant 1.600000e+01 : f32
    %3 = vector.broadcast %cst_2 : f32 to vector<1x1x32xf32>
    %4 = arith.divf %2, %3 : vector<1x1x32xf32>
    %5 = vector.broadcast %4 : vector<1x1x32xf32> to vector<1x16x32xf32>
    %6 = arith.subf %0, %5 : vector<1x16x32xf32>
    %7 = arith.mulf %6, %6 : vector<1x16x32xf32>
    %cst_3 = arith.constant dense<0.000000e+00> : vector<1x32xf32>
    %8 = vector.multi_reduction <add>, %7, %cst_3 [1] : vector<1x16x32xf32> to vector<1x32xf32>
    %9 = vector.shape_cast %8 : vector<1x32xf32> to vector<1x1x32xf32>
    %cst_4 = arith.constant 1.600000e+01 : f32
    %10 = vector.broadcast %cst_4 : f32 to vector<1x1x32xf32>
    %11 = arith.divf %9, %10 : vector<1x1x32xf32>
    %cst_5 = arith.constant 9.99999974E-6 : f32
    %12 = vector.broadcast %cst_5 : f32 to vector<1x1x32xf32>
    %13 = arith.addf %11, %12 : vector<1x1x32xf32>
    %14 = math.rsqrt %13 : vector<1x1x32xf32>
    %15 = vector.broadcast %14 : vector<1x1x32xf32> to vector<1x16x32xf32>
    %16 = arith.mulf %6, %15 : vector<1x16x32xf32>
    %c0_6 = arith.constant 0 : index
    %c0_7 = arith.constant 0 : index
    %17 = vector.load %arg2[%c0_6, %c0_7] : memref<16x1xf32, #tpu.memory_space<vmem>>, vector<16x1xf32>
    %18 = vector.shape_cast %17 : vector<16x1xf32> to vector<1x16x1xf32>
    %19 = vector.broadcast %18 : vector<1x16x1xf32> to vector<1x16x32xf32>
    %20 = arith.mulf %16, %19 : vector<1x16x32xf32>
    %c0_8 = arith.constant 0 : index
    %c0_9 = arith.constant 0 : index
    %21 = vector.load %arg3[%c0_8, %c0_9] : memref<16x1xf32, #tpu.memory_space<vmem>>, vector<16x1xf32>
    %22 = vector.shape_cast %21 : vector<16x1xf32> to vector<1x16x1xf32>
    %23 = vector.broadcast %22 : vector<1x16x1xf32> to vector<1x16x32xf32>
    %24 = arith.addf %20, %23 : vector<1x16x32xf32>
    %c0_10 = arith.constant 0 : index
    %c0_11 = arith.constant 0 : index
    %25 = vector.load %arg4[%c0_10, %c0_11] : memref<32x16xf32, #tpu.memory_space<vmem>>, vector<32x16xf32>
    %c0_12 = arith.constant 0 : index
    %c0_13 = arith.constant 0 : index
    %26 = vector.load %arg6[%c0_12, %c0_13] : memref<16x32xf32, #tpu.memory_space<vmem>>, vector<16x32xf32>
    %c0_14 = arith.constant 0 : index
    %c0_15 = arith.constant 0 : index
    %27 = vector.load %arg5[%c0_14, %c0_15] : memref<32x1xf32, #tpu.memory_space<vmem>>, vector<32x1xf32>
    %c0_16 = arith.constant 0 : index
    %c0_17 = arith.constant 0 : index
    %28 = vector.load %arg7[%c0_16, %c0_17] : memref<16x1xf32, #tpu.memory_space<vmem>>, vector<16x1xf32>
    %29 = vector.shape_cast %24 : vector<1x16x32xf32> to vector<16x32xf32>
    %cst_18 = arith.constant dense<0.000000e+00> : vector<32x32xf32>
    %30 = tpu.matmul %25, %29, %cst_18 {dimension_numbers = #tpu.dot_dimension_numbers<[1], [0], [0], [1], [0, 0, 1, 1], [], []>} : vector<32x16xf32>, vector<16x32xf32>, vector<32x32xf32> -> vector<32x32xf32>
    %31 = vector.broadcast %27 : vector<32x1xf32> to vector<32x32xf32>
    %32 = arith.addf %30, %31 : vector<32x32xf32>
    %cst_19 = arith.constant 5.000000e-01 : f32
    %33 = vector.broadcast %cst_19 : f32 to vector<32x32xf32>
    %34 = arith.mulf %33, %32 : vector<32x32xf32>
    %cst_20 = arith.constant 0.707106769 : f32
    %35 = vector.broadcast %cst_20 : f32 to vector<32x32xf32>
    %36 = arith.mulf %32, %35 : vector<32x32xf32>
    %37 = math.erf %36 : vector<32x32xf32>
    %cst_21 = arith.constant 1.000000e+00 : f32
    %38 = vector.broadcast %cst_21 : f32 to vector<32x32xf32>
    %39 = arith.addf %38, %37 : vector<32x32xf32>
    %40 = arith.mulf %34, %39 : vector<32x32xf32>
    %cst_22 = arith.constant dense<0.000000e+00> : vector<16x32xf32>
    %41 = tpu.matmul %26, %40, %cst_22 {dimension_numbers = #tpu.dot_dimension_numbers<[1], [0], [0], [1], [0, 0, 1, 1], [], []>} : vector<16x32xf32>, vector<32x32xf32>, vector<16x32xf32> -> vector<16x32xf32>
    %42 = vector.shape_cast %0 : vector<1x16x32xf32> to vector<16x32xf32>
    %43 = arith.addf %42, %41 : vector<16x32xf32>
    %44 = vector.broadcast %28 : vector<16x1xf32> to vector<16x32xf32>
    %45 = arith.addf %43, %44 : vector<16x32xf32>
    %c0_23 = arith.constant 0 : index
    %c0_24 = arith.constant 0 : index
    %c0_25 = arith.constant 0 : index
    %46 = vector.load %arg15[%c0_23, %c0_24, %c0_25] : memref<1x16x32xf32, #tpu.memory_space<vmem>>, vector<1x16x32xf32>
    %47 = vector.shape_cast %46 : vector<1x16x32xf32> to vector<16x32xf32>
    %48 = vector.shape_cast %45 : vector<16x32xf32> to vector<1x16x32xf32>
    tpu.vector_store %arg15[%c0_23, %c0_24, %c0_25], %48 {strides = array<i32>} : memref<1x16x32xf32, #tpu.memory_space<vmem>>, vector<1x16x32xf32>,
    %c0_26 = arith.constant 0 : index
    %c0_27 = arith.constant 0 : index
    %c0_28 = arith.constant 0 : index
    %49 = vector.load %arg15[%c0_26, %c0_27, %c0_28] : memref<1x16x32xf32, #tpu.memory_space<vmem>>, vector<1x16x32xf32>
    %50 = vector.shape_cast %49 : vector<1x16x32xf32> to vector<16x32xf32>
    %cst_29 = arith.constant dense<0.000000e+00> : vector<16xf32>
    %51 = vector.multi_reduction <add>, %50, %cst_29 [1] : vector<16x32xf32> to vector<16xf32>
    %52 = vector.shape_cast %51 : vector<16xf32> to vector<16x1xf32>
    %cst_30 = arith.constant 3.200000e+01 : f32
    %53 = vector.broadcast %cst_30 : f32 to vector<16x1xf32>
    %54 = arith.divf %52, %53 : vector<16x1xf32>
    %55 = vector.broadcast %54 : vector<16x1xf32> to vector<16x32xf32>
    %56 = arith.subf %50, %55 : vector<16x32xf32>
    %57 = arith.mulf %56, %56 : vector<16x32xf32>
    %cst_31 = arith.constant dense<0.000000e+00> : vector<16xf32>
    %58 = vector.multi_reduction <add>, %57, %cst_31 [1] : vector<16x32xf32> to vector<16xf32>
    %59 = vector.shape_cast %58 : vector<16xf32> to vector<16x1xf32>
    %cst_32 = arith.constant 3.200000e+01 : f32
    %60 = vector.broadcast %cst_32 : f32 to vector<16x1xf32>
    %61 = arith.divf %59, %60 : vector<16x1xf32>
    %cst_33 = arith.constant 9.99999974E-6 : f32
    %62 = vector.broadcast %cst_33 : f32 to vector<16x1xf32>
    %63 = arith.addf %61, %62 : vector<16x1xf32>
    %64 = math.rsqrt %63 : vector<16x1xf32>
    %65 = vector.broadcast %64 : vector<16x1xf32> to vector<16x32xf32>
    %66 = arith.mulf %56, %65 : vector<16x32xf32>
    %c0_34 = arith.constant 0 : index
    %c0_35 = arith.constant 0 : index
    %67 = vector.load %arg8[%c0_34, %c0_35] : memref<1x32xf32, #tpu.memory_space<vmem>>, vector<1x32xf32>
    %68 = vector.broadcast %67 : vector<1x32xf32> to vector<16x32xf32>
    %69 = arith.mulf %66, %68 : vector<16x32xf32>
    %c0_36 = arith.constant 0 : index
    %c0_37 = arith.constant 0 : index
    %70 = vector.load %arg9[%c0_36, %c0_37] : memref<1x32xf32, #tpu.memory_space<vmem>>, vector<1x32xf32>
    %71 = vector.broadcast %70 : vector<1x32xf32> to vector<16x32xf32>
    %72 = arith.addf %69, %71 : vector<16x32xf32>
    %c0_38 = arith.constant 0 : index
    %c0_39 = arith.constant 0 : index
    %73 = vector.load %arg10[%c0_38, %c0_39] : memref<32x64xf32, #tpu.memory_space<vmem>>, vector<32x64xf32>
    %cst_40 = arith.constant dense<0.000000e+00> : vector<16x64xf32>
    %74 = tpu.matmul %72, %73, %cst_40 {dimension_numbers = #tpu.dot_dimension_numbers<[1], [0], [0], [1], [0, 0, 1, 1], [], []>} : vector<16x32xf32>, vector<32x64xf32>, vector<16x64xf32> -> vector<16x64xf32>
    %c0_41 = arith.constant 0 : index
    %c0_42 = arith.constant 0 : index
    %75 = vector.load %arg11[%c0_41, %c0_42] : memref<1x64xf32, #tpu.memory_space<vmem>>, vector<1x64xf32>
    %76 = vector.broadcast %75 : vector<1x64xf32> to vector<16x64xf32>
    %77 = arith.addf %74, %76 : vector<16x64xf32>
    %cst_43 = arith.constant 5.000000e-01 : f32
    %78 = vector.broadcast %cst_43 : f32 to vector<16x64xf32>
    %79 = arith.mulf %78, %77 : vector<16x64xf32>
    %cst_44 = arith.constant 0.707106769 : f32
    %80 = vector.broadcast %cst_44 : f32 to vector<16x64xf32>
    %81 = arith.mulf %77, %80 : vector<16x64xf32>
    %82 = math.erf %81 : vector<16x64xf32>
    %cst_45 = arith.constant 1.000000e+00 : f32
    %83 = vector.broadcast %cst_45 : f32 to vector<16x64xf32>
    %84 = arith.addf %83, %82 : vector<16x64xf32>
    %85 = arith.mulf %79, %84 : vector<16x64xf32>
    %c0_46 = arith.constant 0 : index
    %c0_47 = arith.constant 0 : index
    %86 = vector.load %arg12[%c0_46, %c0_47] : memref<64x32xf32, #tpu.memory_space<vmem>>, vector<64x32xf32>
    %cst_48 = arith.constant dense<0.000000e+00> : vector<16x32xf32>
    %87 = tpu.matmul %85, %86, %cst_48 {dimension_numbers = #tpu.dot_dimension_numbers<[1], [0], [0], [1], [0, 0, 1, 1], [], []>} : vector<16x64xf32>, vector<64x32xf32>, vector<16x32xf32> -> vector<16x32xf32>
    %c0_49 = arith.constant 0 : index
    %c0_50 = arith.constant 0 : index
    %88 = vector.load %arg13[%c0_49, %c0_50] : memref<1x32xf32, #tpu.memory_space<vmem>>, vector<1x32xf32>
    %89 = vector.broadcast %88 : vector<1x32xf32> to vector<16x32xf32>
    %90 = arith.addf %87, %89 : vector<16x32xf32>
    %91 = arith.addf %50, %90 : vector<16x32xf32>
    %92 = vector.shape_cast %91 : vector<16x32xf32> to vector<1x16x32xf32>
    %c0_51 = arith.constant 0 : index
    %c0_52 = arith.constant 0 : index
    %c0_53 = arith.constant 0 : index
    %93 = vector.load %arg14[%c0_51, %c0_52, %c0_53] : memref<1x16x32xf32, #tpu.memory_space<vmem>>, vector<1x16x32xf32>
    tpu.vector_store %arg14[%c0_51, %c0_52, %c0_53], %92 {strides = array<i32>} : memref<1x16x32xf32, #tpu.memory_space<vmem>>, vector<1x16x32xf32>,
    return
  }
  func.func @transform_0(%arg0: i32) -> (i32, i32, i32) {
    %c0_i32 = arith.constant 0 : i32
    %c0_i32_0 = arith.constant 0 : i32
    %c0_i32_1 = arith.constant 0 : i32
    return %arg0, %c0_i32, %c0_i32_0 : i32, i32, i32
  }
  func.func @transform_1(%arg0: i32) -> (i32, i32) {
    %c0_i32 = arith.constant 0 : i32
    %c0_i32_0 = arith.constant 0 : i32
    %c0_i32_1 = arith.constant 0 : i32
    return %c0_i32, %c0_i32_0 : i32, i32
  }
  func.func @transform_2(%arg0: i32) -> (i32, i32) {
    %c0_i32 = arith.constant 0 : i32
    %c0_i32_0 = arith.constant 0 : i32
    %c0_i32_1 = arith.constant 0 : i32
    return %c0_i32, %c0_i32_0 : i32, i32
  }
  func.func @transform_3(%arg0: i32) -> (i32, i32) {
    %c0_i32 = arith.constant 0 : i32
    %c0_i32_0 = arith.constant 0 : i32
    %c0_i32_1 = arith.constant 0 : i32
    return %c0_i32, %c0_i32_0 : i32, i32
  }
  func.func @transform_4(%arg0: i32) -> (i32, i32) {
    %c0_i32 = arith.constant 0 : i32
    %c0_i32_0 = arith.constant 0 : i32
    %c0_i32_1 = arith.constant 0 : i32
    return %c0_i32, %c0_i32_0 : i32, i32
  }
  func.func @transform_5(%arg0: i32) -> (i32, i32) {
    %c0_i32 = arith.constant 0 : i32
    %c0_i32_0 = arith.constant 0 : i32
    %c0_i32_1 = arith.constant 0 : i32
    return %c0_i32, %c0_i32_0 : i32, i32
  }
  func.func @transform_6(%arg0: i32) -> (i32, i32) {
    %c0_i32 = arith.constant 0 : i32
    %c0_i32_0 = arith.constant 0 : i32
    %c0_i32_1 = arith.constant 0 : i32
    return %c0_i32, %c0_i32_0 : i32, i32
  }
  func.func @transform_7(%arg0: i32) -> (i32, i32) {
    %c0_i32 = arith.constant 0 : i32
    %c0_i32_0 = arith.constant 0 : i32
    %c0_i32_1 = arith.constant 0 : i32
    return %c0_i32, %c0_i32_0 : i32, i32
  }
  func.func @transform_8(%arg0: i32) -> (i32, i32) {
    %c0_i32 = arith.constant 0 : i32
    %c0_i32_0 = arith.constant 0 : i32
    %c0_i32_1 = arith.constant 0 : i32
    return %c0_i32, %c0_i32_0 : i32, i32
  }
  func.func @transform_9(%arg0: i32) -> (i32, i32) {
    %c0_i32 = arith.constant 0 : i32
    %c0_i32_0 = arith.constant 0 : i32
    %c0_i32_1 = arith.constant 0 : i32
    return %c0_i32, %c0_i32_0 : i32, i32
  }
  func.func @transform_10(%arg0: i32) -> (i32, i32) {
    %c0_i32 = arith.constant 0 : i32
    %c0_i32_0 = arith.constant 0 : i32
    %c0_i32_1 = arith.constant 0 : i32
    return %c0_i32, %c0_i32_0 : i32, i32
  }
  func.func @transform_11(%arg0: i32) -> (i32, i32) {
    %c0_i32 = arith.constant 0 : i32
    %c0_i32_0 = arith.constant 0 : i32
    %c0_i32_1 = arith.constant 0 : i32
    return %c0_i32, %c0_i32_0 : i32, i32
  }
  func.func @transform_12(%arg0: i32) -> (i32, i32) {
    %c0_i32 = arith.constant 0 : i32
    %c0_i32_0 = arith.constant 0 : i32
    %c0_i32_1 = arith.constant 0 : i32
    return %c0_i32, %c0_i32_0 : i32, i32
  }
  func.func @transform_13(%arg0: i32) -> (i32, i32, i32) {
    %c0_i32 = arith.constant 0 : i32
    %c0_i32_0 = arith.constant 0 : i32
    %c0_i32_1 = arith.constant 0 : i32
    return %arg0, %c0_i32, %c0_i32_0 : i32, i32, i32
  }
}

</mosaic_0001>

<llo_original>
// kernel: mixer_block_forward.1
$region0: #{mixer_block_forward.1}
  #allocation0 [shape = 'u32[]', space=smem, size = 0x4, offset = 0x4, fixed_abs, tag = 'smem constant byte address 0x4 - core index']
  #allocation1 [shape = 'u32[72,128]{1,0:T(1,128)}', space=vmem, size = 0x9000, scoped, tag = 'internal scratch']
  #allocation2 [shape = 'f32[1,16,32]{2,1,0:T(8,128)}', space=vmem, size = 0x2000, scoped, tag = 'scratch operand']
  %s0 = inlined_call_operand.vmem [shape: f32[2,16,32], index: 0, kind: input, shape index: {}]
  %s1 = inlined_call_operand.vmem [shape: f32[16,1], index: 1, kind: input, shape index: {}]
  %s2 = inlined_call_operand.vmem [shape: f32[16,1], index: 2, kind: input, shape index: {}]
  %s3 = inlined_call_operand.vmem [shape: f32[32,16], index: 3, kind: input, shape index: {}]
  %s4 = inlined_call_operand.vmem [shape: f32[32,1], index: 4, kind: input, shape index: {}]
  %s5 = inlined_call_operand.vmem [shape: f32[16,32], index: 5, kind: input, shape index: {}]
  %s6 = inlined_call_operand.vmem [shape: f32[16,1], index: 6, kind: input, shape index: {}]
  %s7 = inlined_call_operand.vmem [shape: f32[1,32], index: 7, kind: input, shape index: {}]
  %s8 = inlined_call_operand.vmem [shape: f32[1,32], index: 8, kind: input, shape index: {}]
  %s9 = inlined_call_operand.vmem [shape: f32[32,64], index: 9, kind: input, shape index: {}]
  %s10 = inlined_call_operand.vmem [shape: f32[1,64], index: 10, kind: input, shape index: {}]
  %s11 = inlined_call_operand.vmem [shape: f32[64,32], index: 11, kind: input, shape index: {}]
  %s12 = inlined_call_operand.vmem [shape: f32[1,32], index: 12, kind: input, shape index: {}]
  %s13 = inlined_call_operand.hbm [shape: f32[2,16,32], index: 13, kind: output, shape index: {}]
  %s14 = sld [smem:[#allocation0]]
  $region85: #{mixer_block_forward.1} parent=0
    _
  %s16 = ssub.s32 1, %s14
  %s17 = scalar_select 0, %s16, %s14
  $region1: #{mixer_block_forward.1} parent=0
    #allocation3 [shape = 'u8[16384]{0}', space=vmem, size = 0x4000, scoped, tag = 'output window, operand 0']
    #allocation4 [shape = 's32[2]{0}', space=sflag, size = 0x8, scoped, tag = 'scoped memory for mixer_block_forward.1']
    %18 = vsyncpa [#allocation4], 0
    %s19 = scalar_lea.sflag [#allocation4], 1
    %20 = vsyncpa %s19, 0
    loop: start=0, step=1, limit=4
    $region2: #{mixer_block_forward.1} parent=1 // loop_pre_header
      _
    $region3: #{mixer_block_forward.1} parent=1 // loop_header
      %s22 = sphi 0, %s26
      %p23 = scmp.ge.s32.totalorder %s22, 4
      %s32 = sphi 0, %s34
      %s35 = sphi 0, %s32
      %s36 = sphi 0, %s35
      %s52 = sphi 0, %s36
      %s56 = sphi 0, %s56
      %s58 = sphi 0, %s56
      %s59 = sphi 0, %s58
      %s73 = sphi 0, %s59
      %s77 = sphi 0, %s77
      %s79 = sphi 0, %s77
      %s80 = sphi 0, %s79
      %s94 = sphi 0, %s80
      %s98 = sphi 0, %s98
      %s100 = sphi 0, %s98
      %s101 = sphi 0, %s100
      %s115 = sphi 0, %s101
      %s119 = sphi 0, %s119
      %s121 = sphi 0, %s119
      %s122 = sphi 0, %s121
      %s136 = sphi 0, %s122
      %s140 = sphi 0, %s140
      %s142 = sphi 0, %s140
      %s143 = sphi 0, %s142
      %s157 = sphi 0, %s143
      %s161 = sphi 0, %s161
      %s163 = sphi 0, %s161
      %s164 = sphi 0, %s163
      %s178 = sphi 0, %s164
      %s182 = sphi 0, %s182
      %s184 = sphi 0, %s182
      %s185 = sphi 0, %s184
      %s199 = sphi 0, %s185
      %s203 = sphi 0, %s203
      %s205 = sphi 0, %s203
      %s206 = sphi 0, %s205
      %s220 = sphi 0, %s206
      %s224 = sphi 0, %s224
      %s226 = sphi 0, %s224
      %s227 = sphi 0, %s226
      %s241 = sphi 0, %s227
      %s245 = sphi 0, %s245
      %s247 = sphi 0, %s245
      %s248 = sphi 0, %s247
      %s262 = sphi 0, %s248
      %s266 = sphi 0, %s266
      %s268 = sphi 0, %s266
      %s269 = sphi 0, %s268
      %s283 = sphi 0, %s269
      %s287 = sphi 0, %s287
      %s289 = sphi 0, %s287
      %s290 = sphi 0, %s289
      %s304 = sphi 0, %s290
      %s310 = sphi 0, %s312
      %s313 = sphi 0, %s310
      %s314 = sphi 0, %s313
      %s330 = sphi 0, %s314
    $region4: #{mixer_block_forward.1} parent=1 // loop_header_branch
      %25 = sbr.rel (%p23) target = $region8
    $region5: #{mixer_block_forward.1} parent=1 // loop_body
      %s27 = ssub.s32 %s22, 1
      %s28 = ssub.s32 %s22, 2
      %s29 = sadd.s32 %s22, 1
      %s30 = ssub.s32 %s22, %s29
      %p31 = scmp.eq.s32.totalorder %s30, 0
      %s33 = sadd.s32 %s32, 1
      %s34 = scalar_select %p31, %s32, %s33
      %p37 = pneg %p31
      %p38 = scmp.eq.s32.totalorder %s22, 1
      %p39 = por %p37, %p38
      %p40 = scmp.ne.s32.totalorder %s32, %s35
      %p41 = scmp.eq.s32.totalorder %s22, 0
      %p42 = por %p40, %p41
      %p43 = scmp.ne.s32.totalorder %s32, %s35
      %p44 = scmp.eq.s32.totalorder %s27, 1
      %p45 = por %p43, %p44
      %p46 = scmp.ne.s32.totalorder %s35, %s36
      %p47 = scmp.eq.s32.totalorder %s27, 0
      %p48 = por %p46, %p47
      %p49 = scmp.ne.s32.totalorder %s35, %s36
      %p50 = scmp.eq.s32.totalorder %s28, 1
      %p51 = por %p49, %p50
      %p53 = scmp.ne.s32.totalorder %s36, %s52
      %p54 = scmp.eq.s32.totalorder %s28, 0
      %p55 = por %p53, %p54
      %s57 = sadd.s32 %s56, 1
      %p60 = scmp.eq.s32.totalorder %s22, 1
      %p61 = scmp.ne.s32.totalorder %s56, %s58
      %p62 = scmp.eq.s32.totalorder %s22, 0
      %p63 = por %p61, %p62
      %p64 = scmp.ne.s32.totalorder %s56, %s58
      %p65 = scmp.eq.s32.totalorder %s27, 1
      %p66 = por %p64, %p65
      %p67 = scmp.ne.s32.totalorder %s58, %s59
      %p68 = scmp.eq.s32.totalorder %s27, 0
      %p69 = por %p67, %p68
      %p70 = scmp.ne.s32.totalorder %s58, %s59
      %p71 = scmp.eq.s32.totalorder %s28, 1
      %p72 = por %p70, %p71
      %p74 = scmp.ne.s32.totalorder %s59, %s73
      %p75 = scmp.eq.s32.totalorder %s28, 0
      %p76 = por %p74, %p75
      %s78 = sadd.s32 %s77, 1
      %p81 = scmp.eq.s32.totalorder %s22, 1
      %p82 = scmp.ne.s32.totalorder %s77, %s79
      %p83 = scmp.eq.s32.totalorder %s22, 0
      %p84 = por %p82, %p83
      %p85 = scmp.ne.s32.totalorder %s77, %s79
      %p86 = scmp.eq.s32.totalorder %s27, 1
      %p87 = por %p85, %p86
      %p88 = scmp.ne.s32.totalorder %s79, %s80
      %p89 = scmp.eq.s32.totalorder %s27, 0
      %p90 = por %p88, %p89
      %p91 = scmp.ne.s32.totalorder %s79, %s80
      %p92 = scmp.eq.s32.totalorder %s28, 1
      %p93 = por %p91, %p92
      %p95 = scmp.ne.s32.totalorder %s80, %s94
      %p96 = scmp.eq.s32.totalorder %s28, 0
      %p97 = por %p95, %p96
      %s99 = sadd.s32 %s98, 1
      %p102 = scmp.eq.s32.totalorder %s22, 1
      %p103 = scmp.ne.s32.totalorder %s98, %s100
      %p104 = scmp.eq.s32.totalorder %s22, 0
      %p105 = por %p103, %p104
      %p106 = scmp.ne.s32.totalorder %s98, %s100
      %p107 = scmp.eq.s32.totalorder %s27, 1
      %p108 = por %p106, %p107
      %p109 = scmp.ne.s32.totalorder %s100, %s101
      %p110 = scmp.eq.s32.totalorder %s27, 0
      %p111 = por %p109, %p110
      %p112 = scmp.ne.s32.totalorder %s100, %s101
      %p113 = scmp.eq.s32.totalorder %s28, 1
      %p114 = por %p112, %p113
      %p116 = scmp.ne.s32.totalorder %s101, %s115
      %p117 = scmp.eq.s32.totalorder %s28, 0
      %p118 = por %p116, %p117
      %s120 = sadd.s32 %s119, 1
      %p123 = scmp.eq.s32.totalorder %s22, 1
      %p124 = scmp.ne.s32.totalorder %s119, %s121
      %p125 = scmp.eq.s32.totalorder %s22, 0
      %p126 = por %p124, %p125
      %p127 = scmp.ne.s32.totalorder %s119, %s121
      %p128 = scmp.eq.s32.totalorder %s27, 1
      %p129 = por %p127, %p128
      %p130 = scmp.ne.s32.totalorder %s121, %s122
      %p131 = scmp.eq.s32.totalorder %s27, 0
      %p132 = por %p130, %p131
      %p133 = scmp.ne.s32.totalorder %s121, %s122
      %p134 = scmp.eq.s32.totalorder %s28, 1
      %p135 = por %p133, %p134
      %p137 = scmp.ne.s32.totalorder %s122, %s136
      %p138 = scmp.eq.s32.totalorder %s28, 0
      %p139 = por %p137, %p138
      %s141 = sadd.s32 %s140, 1
      %p144 = scmp.eq.s32.totalorder %s22, 1
      %p145 = scmp.ne.s32.totalorder %s140, %s142
      %p146 = scmp.eq.s32.totalorder %s22, 0
      %p147 = por %p145, %p146
      %p148 = scmp.ne.s32.totalorder %s140, %s142
      %p149 = scmp.eq.s32.totalorder %s27, 1
      %p150 = por %p148, %p149
      %p151 = scmp.ne.s32.totalorder %s142, %s143
      %p152 = scmp.eq.s32.totalorder %s27, 0
      %p153 = por %p151, %p152
      %p154 = scmp.ne.s32.totalorder %s142, %s143
      %p155 = scmp.eq.s32.totalorder %s28, 1
      %p156 = por %p154, %p155
      %p158 = scmp.ne.s32.totalorder %s143, %s157
      %p159 = scmp.eq.s32.totalorder %s28, 0
      %p160 = por %p158, %p159
      %s162 = sadd.s32 %s161, 1
      %p165 = scmp.eq.s32.totalorder %s22, 1
      %p166 = scmp.ne.s32.totalorder %s161, %s163
      %p167 = scmp.eq.s32.totalorder %s22, 0
      %p168 = por %p166, %p167
      %p169 = scmp.ne.s32.totalorder %s161, %s163
      %p170 = scmp.eq.s32.totalorder %s27, 1
      %p171 = por %p169, %p170
      %p172 = scmp.ne.s32.totalorder %s163, %s164
      %p173 = scmp.eq.s32.totalorder %s27, 0
      %p174 = por %p172, %p173
      %p175 = scmp.ne.s32.totalorder %s163, %s164
      %p176 = scmp.eq.s32.totalorder %s28, 1
      %p177 = por %p175, %p176
      %p179 = scmp.ne.s32.totalorder %s164, %s178
      %p180 = scmp.eq.s32.totalorder %s28, 0
      %p181 = por %p179, %p180
      %s183 = sadd.s32 %s182, 1
      %p186 = scmp.eq.s32.totalorder %s22, 1
      %p187 = scmp.ne.s32.totalorder %s182, %s184
      %p188 = scmp.eq.s32.totalorder %s22, 0
      %p189 = por %p187, %p188
      %p190 = scmp.ne.s32.totalorder %s182, %s184
      %p191 = scmp.eq.s32.totalorder %s27, 1
      %p192 = por %p190, %p191
      %p193 = scmp.ne.s32.totalorder %s184, %s185
      %p194 = scmp.eq.s32.totalorder %s27, 0
      %p195 = por %p193, %p194
      %p196 = scmp.ne.s32.totalorder %s184, %s185
      %p197 = scmp.eq.s32.totalorder %s28, 1
      %p198 = por %p196, %p197
      %p200 = scmp.ne.s32.totalorder %s185, %s199
      %p201 = scmp.eq.s32.totalorder %s28, 0
      %p202 = por %p200, %p201
      %s204 = sadd.s32 %s203, 1
      %p207 = scmp.eq.s32.totalorder %s22, 1
      %p208 = scmp.ne.s32.totalorder %s203, %s205
      %p209 = scmp.eq.s32.totalorder %s22, 0
      %p210 = por %p208, %p209
      %p211 = scmp.ne.s32.totalorder %s203, %s205
      %p212 = scmp.eq.s32.totalorder %s27, 1
      %p213 = por %p211, %p212
      %p214 = scmp.ne.s32.totalorder %s205, %s206
      %p215 = scmp.eq.s32.totalorder %s27, 0
      %p216 = por %p214, %p215
      %p217 = scmp.ne.s32.totalorder %s205, %s206
      %p218 = scmp.eq.s32.totalorder %s28, 1
      %p219 = por %p217, %p218
      %p221 = scmp.ne.s32.totalorder %s206, %s220
      %p222 = scmp.eq.s32.totalorder %s28, 0
      %p223 = por %p221, %p222
      %s225 = sadd.s32 %s224, 1
      %p228 = scmp.eq.s32.totalorder %s22, 1
      %p229 = scmp.ne.s32.totalorder %s224, %s226
      %p230 = scmp.eq.s32.totalorder %s22, 0
      %p231 = por %p229, %p230
      %p232 = scmp.ne.s32.totalorder %s224, %s226
      %p233 = scmp.eq.s32.totalorder %s27, 1
      %p234 = por %p232, %p233
      %p235 = scmp.ne.s32.totalorder %s226, %s227
      %p236 = scmp.eq.s32.totalorder %s27, 0
      %p237 = por %p235, %p236
      %p238 = scmp.ne.s32.totalorder %s226, %s227
      %p239 = scmp.eq.s32.totalorder %s28, 1
      %p240 = por %p238, %p239
      %p242 = scmp.ne.s32.totalorder %s227, %s241
      %p243 = scmp.eq.s32.totalorder %s28, 0
      %p244 = por %p242, %p243
      %s246 = sadd.s32 %s245, 1
      %p249 = scmp.eq.s32.totalorder %s22, 1
      %p250 = scmp.ne.s32.totalorder %s245, %s247
      %p251 = scmp.eq.s32.totalorder %s22, 0
      %p252 = por %p250, %p251
      %p253 = scmp.ne.s32.totalorder %s245, %s247
      %p254 = scmp.eq.s32.totalorder %s27, 1
      %p255 = por %p253, %p254
      %p256 = scmp.ne.s32.totalorder %s247, %s248
      %p257 = scmp.eq.s32.totalorder %s27, 0
      %p258 = por %p256, %p257
      %p259 = scmp.ne.s32.totalorder %s247, %s248
      %p260 = scmp.eq.s32.totalorder %s28, 1
      %p261 = por %p259, %p260
      %p263 = scmp.ne.s32.totalorder %s248, %s262
      %p264 = scmp.eq.s32.totalorder %s28, 0
      %p265 = por %p263, %p264
      %s267 = sadd.s32 %s266, 1
      %p270 = scmp.eq.s32.totalorder %s22, 1
      %p271 = scmp.ne.s32.totalorder %s266, %s268
      %p272 = scmp.eq.s32.totalorder %s22, 0
      %p273 = por %p271, %p272
      %p274 = scmp.ne.s32.totalorder %s266, %s268
      %p275 = scmp.eq.s32.totalorder %s27, 1
      %p276 = por %p274, %p275
      %p277 = scmp.ne.s32.totalorder %s268, %s269
      %p278 = scmp.eq.s32.totalorder %s27, 0
      %p279 = por %p277, %p278
      %p280 = scmp.ne.s32.totalorder %s268, %s269
      %p281 = scmp.eq.s32.totalorder %s28, 1
      %p282 = por %p280, %p281
      %p284 = scmp.ne.s32.totalorder %s269, %s283
      %p285 = scmp.eq.s32.totalorder %s28, 0
      %p286 = por %p284, %p285
      %s288 = sadd.s32 %s287, 1
      %p291 = scmp.eq.s32.totalorder %s22, 1
      %p292 = scmp.ne.s32.totalorder %s287, %s289
      %p293 = scmp.eq.s32.totalorder %s22, 0
      %p294 = por %p292, %p293
      %p295 = scmp.ne.s32.totalorder %s287, %s289
      %p296 = scmp.eq.s32.totalorder %s27, 1
      %p297 = por %p295, %p296
      %p298 = scmp.ne.s32.totalorder %s289, %s290
      %p299 = scmp.eq.s32.totalorder %s27, 0
      %p300 = por %p298, %p299
      %p301 = scmp.ne.s32.totalorder %s289, %s290
      %p302 = scmp.eq.s32.totalorder %s28, 1
      %p303 = por %p301, %p302
      %p305 = scmp.ne.s32.totalorder %s290, %s304
      %p306 = scmp.eq.s32.totalorder %s28, 0
      %p307 = por %p305, %p306
      %s308 = ssub.s32 %s22, %s29
      %p309 = scmp.eq.s32.totalorder %s308, 0
      %s311 = sadd.s32 %s310, 1
      %s312 = scalar_select %p309, %s310, %s311
      %p315 = pneg %p309
      %p316 = scmp.eq.s32.totalorder %s22, 1
      %p317 = por %p315, %p316
      %p318 = scmp.ne.s32.totalorder %s310, %s313
      %p319 = scmp.eq.s32.totalorder %s22, 0
      %p320 = por %p318, %p319
      %p321 = scmp.ne.s32.totalorder %s310, %s313
      %p322 = scmp.eq.s32.totalorder %s27, 1
      %p323 = por %p321, %p322
      %p324 = scmp.ne.s32.totalorder %s313, %s314
      %p325 = scmp.eq.s32.totalorder %s27, 0
      %p326 = por %p324, %p325
      %p327 = scmp.ne.s32.totalorder %s313, %s314
      %p328 = scmp.eq.s32.totalorder %s28, 1
      %p329 = por %p327, %p328
      %p331 = scmp.ne.s32.totalorder %s314, %s330
      %p332 = scmp.eq.s32.totalorder %s28, 0
      %p333 = por %p331, %p332
      %p334 = scmp.le.s32.totalorder 1, %s22
      %p335 = scmp.lt.s32.totalorder %s22, 3
      %p336 = pnand %p334, %p335
      %p337 = pneg %p336
      // Predicated region
      $region9: #{mixer_block_forward.1} parent=5 // pred_check
        _
      $region10: #{mixer_block_forward.1} parent=5 // pred_check_branch
        %339 = sbr.rel (%p336) target = $region12
      $region11: #{mixer_block_forward.1} parent=5 // pred_region
        %s340 = ssub.s32 %s22, 1
        // Predicated region
        $region13: #{mixer_block_forward.1} parent=11 // pred_check
          %p341 = pneg %p69
        $region14: #{mixer_block_forward.1} parent=11 // pred_check_branch
          %343 = sbr.rel (%p341) target = $region16
        $region15: #{mixer_block_forward.1} parent=11 // pred_region
          _
        $region16: #{mixer_block_forward.1} parent=11 // pred_fallthru
          _
        // Predicated region
        $region17: #{mixer_block_forward.1} parent=11 // pred_check
          %p344 = pneg %p90
        $region18: #{mixer_block_forward.1} parent=11 // pred_check_branch
          %346 = sbr.rel (%p344) target = $region20
        $region19: #{mixer_block_forward.1} parent=11 // pred_region
          _
        $region20: #{mixer_block_forward.1} parent=11 // pred_fallthru
          _
        // Predicated region
        $region21: #{mixer_block_forward.1} parent=11 // pred_check
          %p347 = pneg %p111
        $region22: #{mixer_block_forward.1} parent=11 // pred_check_branch
          %349 = sbr.rel (%p347) target = $region24
        $region23: #{mixer_block_forward.1} parent=11 // pred_region
          _
        $region24: #{mixer_block_forward.1} parent=11 // pred_fallthru
          _
        // Predicated region
        $region25: #{mixer_block_forward.1} parent=11 // pred_check
          %p350 = pneg %p132
        $region26: #{mixer_block_forward.1} parent=11 // pred_check_branch
          %352 = sbr.rel (%p350) target = $region28
        $region27: #{mixer_block_forward.1} parent=11 // pred_region
          _
        $region28: #{mixer_block_forward.1} parent=11 // pred_fallthru
          _
        // Predicated region
        $region29: #{mixer_block_forward.1} parent=11 // pred_check
          %p353 = pneg %p153
        $region30: #{mixer_block_forward.1} parent=11 // pred_check_branch
          %355 = sbr.rel (%p353) target = $region32
        $region31: #{mixer_block_forward.1} parent=11 // pred_region
          _
        $region32: #{mixer_block_forward.1} parent=11 // pred_fallthru
          _
        // Predicated region
        $region33: #{mixer_block_forward.1} parent=11 // pred_check
          %p356 = pneg %p174
        $region34: #{mixer_block_forward.1} parent=11 // pred_check_branch
          %358 = sbr.rel (%p356) target = $region36
        $region35: #{mixer_block_forward.1} parent=11 // pred_region
          _
        $region36: #{mixer_block_forward.1} parent=11 // pred_fallthru
          _
        // Predicated region
        $region37: #{mixer_block_forward.1} parent=11 // pred_check
          %p359 = pneg %p195
        $region38: #{mixer_block_forward.1} parent=11 // pred_check_branch
          %361 = sbr.rel (%p359) target = $region40
        $region39: #{mixer_block_forward.1} parent=11 // pred_region
          _
        $region40: #{mixer_block_forward.1} parent=11 // pred_fallthru
          _
        // Predicated region
        $region41: #{mixer_block_forward.1} parent=11 // pred_check
          %p362 = pneg %p216
        $region42: #{mixer_block_forward.1} parent=11 // pred_check_branch
          %364 = sbr.rel (%p362) target = $region44
        $region43: #{mixer_block_forward.1} parent=11 // pred_region
          _
        $region44: #{mixer_block_forward.1} parent=11 // pred_fallthru
          _
        // Predicated region
        $region45: #{mixer_block_forward.1} parent=11 // pred_check
          %p365 = pneg %p237
        $region46: #{mixer_block_forward.1} parent=11 // pred_check_branch
          %367 = sbr.rel (%p365) target = $region48
        $region47: #{mixer_block_forward.1} parent=11 // pred_region
          _
        $region48: #{mixer_block_forward.1} parent=11 // pred_fallthru
          _
        // Predicated region
        $region49: #{mixer_block_forward.1} parent=11 // pred_check
          %p368 = pneg %p258
        $region50: #{mixer_block_forward.1} parent=11 // pred_check_branch
          %370 = sbr.rel (%p368) target = $region52
        $region51: #{mixer_block_forward.1} parent=11 // pred_region
          _
        $region52: #{mixer_block_forward.1} parent=11 // pred_fallthru
          _
        // Predicated region
        $region53: #{mixer_block_forward.1} parent=11 // pred_check
          %p371 = pneg %p279
        $region54: #{mixer_block_forward.1} parent=11 // pred_check_branch
          %373 = sbr.rel (%p371) target = $region56
        $region55: #{mixer_block_forward.1} parent=11 // pred_region
          _
        $region56: #{mixer_block_forward.1} parent=11 // pred_fallthru
          _
        // Predicated region
        $region57: #{mixer_block_forward.1} parent=11 // pred_check
          %p374 = pneg %p300
        $region58: #{mixer_block_forward.1} parent=11 // pred_check_branch
          %376 = sbr.rel (%p374) target = $region60
        $region59: #{mixer_block_forward.1} parent=11 // pred_region
          _
        $region60: #{mixer_block_forward.1} parent=11 // pred_fallthru
          _
      $region12: #{mixer_block_forward.1} parent=5 // pred_fallthru
        _
      %p377 = scmp.lt.s32.totalorder %s22, 2
      // Predicated region
      $region61: #{mixer_block_forward.1} parent=5 // pred_check
        %p378 = pneg %p377
      $region62: #{mixer_block_forward.1} parent=5 // pred_check_branch
        %380 = sbr.rel (%p378) target = $region64
      $region63: #{mixer_block_forward.1} parent=5 // pred_region
        // Predicated region
        $region65: #{mixer_block_forward.1} parent=63 // pred_check
          %p381 = pneg %p42
        $region66: #{mixer_block_forward.1} parent=63 // pred_check_branch
          %383 = sbr.rel (%p381) target = $region68
        $region67: #{mixer_block_forward.1} parent=63 // pred_region
          %p384 = scmp.lt.s32.totalorder %s22, 1
          %s385 = scalar_select %p384, %s22, 1
          %s386 = smul.addr %s385, 2
          %s387 = smul.addr %s386, 8
          %s388 = scalar_lea.vmem %s0, %s387
        $region68: #{mixer_block_forward.1} parent=63 // pred_fallthru
          _
      $region64: #{mixer_block_forward.1} parent=5 // pred_fallthru
        _
      %p389 = scmp.le.s32.totalorder 1, %s22
      %p390 = scmp.lt.s32.totalorder %s22, 3
      %p391 = pnand %p389, %p390
      %p392 = pneg %p391
      // Predicated region
      $region69: #{mixer_block_forward.1} parent=5 // pred_check
        _
      $region70: #{mixer_block_forward.1} parent=5 // pred_check_branch
        %394 = sbr.rel (%p391) target = $region72
      $region71: #{mixer_block_forward.1} parent=5 // pred_region
        %s395 = ssub.s32 %s22, 1
        %p396 = scmp.lt.s32.totalorder %s27, 1
        %s397 = scalar_select %p396, %s27, 1
        %s398 = smul.addr %s397, 2
        %s399 = smul.addr %s398, 8
        %s400 = scalar_lea.vmem %s0, %s399
        %p401 = pneg %p48
        %p402 = pneg %p45
        %p403 = pneg %p69
        %p404 = pneg %p66
        %p405 = pneg %p90
        %p406 = pneg %p87
        %p407 = pneg %p111
        %p408 = pneg %p108
        %p409 = pneg %p132
        %p410 = pneg %p129
        %p411 = pneg %p153
        %p412 = pneg %p150
        %p413 = pneg %p174
        %p414 = pneg %p171
        %p415 = pneg %p195
        %p416 = pneg %p192
        %p417 = pneg %p216
        %p418 = pneg %p213
        %p419 = pneg %p237
        %p420 = pneg %p234
        %p421 = pneg %p258
        %p422 = pneg %p255
        %p423 = pneg %p279
        %p424 = pneg %p276
        %p425 = pneg %p300
        %p426 = pneg %p297
        %p427 = pneg %p326
        %p428 = pneg %p323
        %s429 = sand.u32 %s313, 1
        %s430 = scalar_lea.sflag [#allocation4], %s429
        %s431 = sand.u32 %s313, 1
        %s432 = smul.addr %s431, 16
        %s433 = scalar_lea.vmem [#allocation3], %s432
        %p434 = scmp.lt.s32.totalorder %s27, 1
        %s435 = scalar_select %p434, %s27, 1
        %s436 = smul.addr %s435, 2
        %s437 = smul.addr %s436, 8
        %s438 = scalar_lea.vmem %s0, %s437
        %v439 = vld [vmem:[%s438] sm:$0xff]
        %v440 = vld [vmem:[%s438 + $0x8] sm:$0xff]
        %vm441 = vcmask 261120
        %v442 = vsel %vm441, %v439, 0.0
        %v443 = vsel %vm441, %v440, 0.0
        %v444 = vadd.f32 %v442, %v443
        %v445 = vrot.slane %v444, 4
        %v446 = vadd.f32 %v444, %v445
        %v447 = vrot.slane %v446, 2
        %v448 = vadd.f32 %v446, %v447
        %v449 = vrot.slane %v448, 1
        %v450 = vadd.f32 %v448, %v449
        %v451 = vrcp.pop 16.0
        %v452 = vmul.f32 16.0, %v451
        %v453 = vsub.f32 1.0, %v452
        %v454 = vmul.f32 %v451, %v453
        %v455 = vadd.f32 %v451, %v454
        %vm456 = vweird.f32 %v451
        %v457 = vsel %vm456, %v451, %v455
        %v458 = vmul.f32 %v450, %v457
        %v459 = vsub.f32 %v439, %v458
        %v460 = vsub.f32 %v440, %v458
        %v461 = vmul.f32 %v459, %v459
        %v462 = vmul.f32 %v460, %v460
        %v463 = vsel %vm441, %v461, 0.0
        %v464 = vsel %vm441, %v462, 0.0
        %v465 = vadd.f32 %v463, %v464
        %v466 = vrot.slane %v465, 4
        %v467 = vadd.f32 %v465, %v466
        %v468 = vrot.slane %v467, 2
        %v469 = vadd.f32 %v467, %v468
        %v470 = vrot.slane %v469, 1
        %v471 = vadd.f32 %v469, %v470
        %v472 = vmul.f32 %v471, %v457
        %v473 = vadd.f32 %v472, 1e-05
        %v474 = vrsqrt.pop %v473
        %v475 = vmul.f32 %v474, %v473
        %v476 = vmul.f32 %v475, %v474
        %v477 = vmul.f32 0.5, %v476
        %v478 = vsub.f32 1.5, %v477
        %v479 = vmul.f32 %v474, %v478
        %vm480 = vweird.f32 %v473
        %vm481 = vweird.f32 %v474
        %vm482 = vmor %vm480, %vm481
        %v483 = vsel %vm482, %v474, %v479
        %v484 = vmul.f32 %v459, %v483
        %v485 = vmul.f32 %v460, %v483
        %v486 = vld [vmem:[%s1] sm:$0xff]
        %v487 = vld [vmem:[%s1 + $0x8] sm:$0xff]
        %489 = vset.pattern.permute.xlu0 0
        %490 = vperm.xlu0 %489, %v486
        %v491 = vpop.permute.xlu0 %490
        %494 = vset.pattern.permute.xlu0 0
        %495 = vperm.xlu0 %494, %v487
        %v496 = vpop.permute.xlu0 %495
        %v498 = vmul.f32 %v484, %v491
        %v499 = vmul.f32 %v485, %v496
        %v500 = vld [vmem:[%s2] sm:$0xff]
        %v501 = vld [vmem:[%s2 + $0x8] sm:$0xff]
        %503 = vset.pattern.permute.xlu0 0
        %504 = vperm.xlu0 %503, %v500
        %v505 = vpop.permute.xlu0 %504
        %508 = vset.pattern.permute.xlu0 0
        %509 = vperm.xlu0 %508, %v501
        %v510 = vpop.permute.xlu0 %509
        %v512 = vadd.f32 %v498, %v505
        %v513 = vadd.f32 %v499, %v510
        %v514 = vld [vmem:[%s3] sm:$0xff]
        %v515 = vld [vmem:[%s3 + $0x8] sm:$0xff]
        %v516 = vld [vmem:[%s3 + $0x10] sm:$0xff]
        %v517 = vld [vmem:[%s3 + $0x18] sm:$0xff]
        %v518 = vld [vmem:[%s5] sm:$0xff]
        %v519 = vld [vmem:[%s5 + $0x8] sm:$0xff]
        %v520 = vld [vmem:[%s4] sm:$0xff]
        %v521 = vld [vmem:[%s4 + $0x8] sm:$0xff]
        %v522 = vld [vmem:[%s4 + $0x10] sm:$0xff]
        %v523 = vld [vmem:[%s4 + $0x18] sm:$0xff]
        %v524 = vld [vmem:[%s6] sm:$0xff]
        %v525 = vld [vmem:[%s6 + $0x8] sm:$0xff]
        %527 = vset.pattern.permute.xlu0 0
        %528 = vperm.xlu0 %527, %v520
        %v529 = vpop.permute.xlu0 %528
        %532 = vset.pattern.permute.xlu0 0
        %533 = vperm.xlu0 %532, %v521
        %v534 = vpop.permute.xlu0 %533
        %537 = vset.pattern.permute.xlu0 0
        %538 = vperm.xlu0 %537, %v522
        %v539 = vpop.permute.xlu0 %538
        %542 = vset.pattern.permute.xlu0 0
        %543 = vperm.xlu0 %542, %v523
        %v544 = vpop.permute.xlu0 %543
        %vm546 = vcmask 130048
        %v548 = vsel %vm546, %v514, 0
        %v551 = vsel %vm546, %v515, 0
        %v554 = vsel %vm546, %v516, 0
        %v557 = vsel %vm546, %v517, 0
        %559 = vmatpush.msra.mxu0 0.0
        %560 = vmatpush.msra.mxu0 0.0
        %561 = vmatpush.msra.mxu0 0.0
        %562 = vmatpush.msra.mxu0 0.0
        %563 = vmatpush.msra.mxu0 0.0
        %564 = vmatpush.msra.mxu0 0.0
        %565 = vmatpush.msra.mxu0 0.0
        %566 = vmatpush.msra.mxu0 0.0
        %567 = vmatpush.msra.mxu0 0.0
        %568 = vmatpush.msra.mxu0 0.0
        %569 = vmatpush.msra.mxu0 0.0
        %570 = vmatpush.msra.mxu0 0.0
        %571 = vmatpush.msra.mxu0 0.0
        %572 = vmatpush.msra.mxu0 0.0
        %573 = vmatpush.msra.mxu0 %v513
        %574 = vmatpush.msra.mxu0 %v512
        %575 = vmatmul.f32.gmra.mxu0 %v548
        %v576 = vpop.f32.mrf.mxu0
        %v577 = vadd.f32 %v529, %v576
        %578 = vmatmul.f32.gmra.mxu0 %v551
        %v579 = vpop.f32.mrf.mxu0
        %v580 = vadd.f32 %v534, %v579
        %581 = vmatmul.f32.gmra.mxu0 %v554
        %v582 = vpop.f32.mrf.mxu0
        %v583 = vadd.f32 %v539, %v582
        %584 = vmatmul.f32.gmra.mxu0 %v557
        %v585 = vpop.f32.mrf.mxu0
        %v586 = vadd.f32 %v544, %v585
        %587 = vdwg.mxu0
        %v588 = vmul.f32 %v577, 0.5
        %v589 = vmul.f32 %v580, 0.5
        %v590 = vmul.f32 %v583, 0.5
        %v591 = vmul.f32 %v586, 0.5
        %v592 = vmul.f32 %v577, 0.70710677
        %v593 = vmul.f32 %v580, 0.70710677
        %v594 = vmul.f32 %v583, 0.70710677
        %v595 = vmul.f32 %v586, 0.70710677
        %v596 = vmul.f32 %v592, %v592
        %v597 = vmin.f32 16.0, %v596
        %v598 = vmul.f32 %v597, 2.1237322e-06
        %v599 = vadd.f32 %v598, 0.00028619796
        %v600 = vmul.f32 %v597, %v599
        %v601 = vadd.f32 %v600, 0.0036580483
        %v602 = vmul.f32 %v597, %v601
        %v603 = vadd.f32 %v602, 0.05243302
        %v604 = vmul.f32 %v597, %v603
        %v605 = vadd.f32 %v604, 0.18741608
        %v606 = vmul.f32 %v597, %v605
        %v607 = vadd.f32 %v606, 1.1283791
        %v608 = vmul.f32 %v592, %v607
        %v609 = vmul.f32 %v597, 3.8918573e-05
        %v610 = vadd.f32 %v609, 0.001143296
        %v611 = vmul.f32 %v597, %v610
        %v612 = vadd.f32 %v611, 0.014752088
        %v613 = vmul.f32 %v597, %v612
        %v614 = vadd.f32 %v613, 0.112945676
        %v615 = vmul.f32 %v597, %v614
        %v616 = vadd.f32 %v615, 0.4994258
        %v617 = vmul.f32 %v597, %v616
        %v618 = vadd.f32 %v617, 1.0
        %v619 = vrcp.pop %v618
        %v620 = vmul.f32 %v618, %v619
        %v621 = vsub.f32 1.0, %v620
        %v622 = vmul.f32 %v619, %v621
        %v623 = vadd.f32 %v619, %v622
        %vm624 = vweird.f32 %v618
        %vm625 = vweird.f32 %v619
        %vm626 = vmor %vm624, %vm625
        %v627 = vsel %vm626, %v619, %v623
        %v628 = vand.u32 2147483647, %v618
        %vm629 = vcmp.eq.f32.partialorder %v628, 8.507059e+37
        %v630 = vand.u32 %v618, 2147483648
        %v631 = vor.u32 1.1754944e-38, %v630
        %v632 = vsel %vm629, %v631, %v627
        %v633 = vmul.f32 %v608, %v632
        %v634 = vmin.f32 %v633, 1.0
        %v635 = vmax.f32 %v634, -1.0
        %v636 = vmul.f32 %v593, %v593
        %v637 = vmin.f32 16.0, %v636
        %v638 = vmul.f32 %v637, 2.1237322e-06
        %v639 = vadd.f32 %v638, 0.00028619796
        %v640 = vmul.f32 %v637, %v639
        %v641 = vadd.f32 %v640, 0.0036580483
        %v642 = vmul.f32 %v637, %v641
        %v643 = vadd.f32 %v642, 0.05243302
        %v644 = vmul.f32 %v637, %v643
        %v645 = vadd.f32 %v644, 0.18741608
        %v646 = vmul.f32 %v637, %v645
        %v647 = vadd.f32 %v646, 1.1283791
        %v648 = vmul.f32 %v593, %v647
        %v649 = vmul.f32 %v637, 3.8918573e-05
        %v650 = vadd.f32 %v649, 0.001143296
        %v651 = vmul.f32 %v637, %v650
        %v652 = vadd.f32 %v651, 0.014752088
        %v653 = vmul.f32 %v637, %v652
        %v654 = vadd.f32 %v653, 0.112945676
        %v655 = vmul.f32 %v637, %v654
        %v656 = vadd.f32 %v655, 0.4994258
        %v657 = vmul.f32 %v637, %v656
        %v658 = vadd.f32 %v657, 1.0
        %v659 = vrcp.pop %v658
        %v660 = vmul.f32 %v658, %v659
        %v661 = vsub.f32 1.0, %v660
        %v662 = vmul.f32 %v659, %v661
        %v663 = vadd.f32 %v659, %v662
        %vm664 = vweird.f32 %v658
        %vm665 = vweird.f32 %v659
        %vm666 = vmor %vm664, %vm665
        %v667 = vsel %vm666, %v659, %v663
        %v668 = vand.u32 2147483647, %v658
        %vm669 = vcmp.eq.f32.partialorder %v668, 8.507059e+37
        %v670 = vand.u32 %v658, 2147483648
        %v671 = vor.u32 1.1754944e-38, %v670
        %v672 = vsel %vm669, %v671, %v667
        %v673 = vmul.f32 %v648, %v672
        %v674 = vmin.f32 %v673, 1.0
        %v675 = vmax.f32 %v674, -1.0
        %v676 = vmul.f32 %v594, %v594
        %v677 = vmin.f32 16.0, %v676
        %v678 = vmul.f32 %v677, 2.1237322e-06
        %v679 = vadd.f32 %v678, 0.00028619796
        %v680 = vmul.f32 %v677, %v679
        %v681 = vadd.f32 %v680, 0.0036580483
        %v682 = vmul.f32 %v677, %v681
        %v683 = vadd.f32 %v682, 0.05243302
        %v684 = vmul.f32 %v677, %v683
        %v685 = vadd.f32 %v684, 0.18741608
        %v686 = vmul.f32 %v677, %v685
        %v687 = vadd.f32 %v686, 1.1283791
        %v688 = vmul.f32 %v594, %v687
        %v689 = vmul.f32 %v677, 3.8918573e-05
        %v690 = vadd.f32 %v689, 0.001143296
        %v691 = vmul.f32 %v677, %v690
        %v692 = vadd.f32 %v691, 0.014752088
        %v693 = vmul.f32 %v677, %v692
        %v694 = vadd.f32 %v693, 0.112945676
        %v695 = vmul.f32 %v677, %v694
        %v696 = vadd.f32 %v695, 0.4994258
        %v697 = vmul.f32 %v677, %v696
        %v698 = vadd.f32 %v697, 1.0
        %v699 = vrcp.pop %v698
        %v700 = vmul.f32 %v698, %v699
        %v701 = vsub.f32 1.0, %v700
        %v702 = vmul.f32 %v699, %v701
        %v703 = vadd.f32 %v699, %v702
        %vm704 = vweird.f32 %v698
        %vm705 = vweird.f32 %v699
        %vm706 = vmor %vm704, %vm705
        %v707 = vsel %vm706, %v699, %v703
        %v708 = vand.u32 2147483647, %v698
        %vm709 = vcmp.eq.f32.partialorder %v708, 8.507059e+37
        %v710 = vand.u32 %v698, 2147483648
        %v711 = vor.u32 1.1754944e-38, %v710
        %v712 = vsel %vm709, %v711, %v707
        %v713 = vmul.f32 %v688, %v712
        %v714 = vmin.f32 %v713, 1.0
        %v715 = vmax.f32 %v714, -1.0
        %v716 = vmul.f32 %v595, %v595
        %v717 = vmin.f32 16.0, %v716
        %v718 = vmul.f32 %v717, 2.1237322e-06
        %v719 = vadd.f32 %v718, 0.00028619796
        %v720 = vmul.f32 %v717, %v719
        %v721 = vadd.f32 %v720, 0.0036580483
        %v722 = vmul.f32 %v717, %v721
        %v723 = vadd.f32 %v722, 0.05243302
        %v724 = vmul.f32 %v717, %v723
        %v725 = vadd.f32 %v724, 0.18741608
        %v726 = vmul.f32 %v717, %v725
        %v727 = vadd.f32 %v726, 1.1283791
        %v728 = vmul.f32 %v595, %v727
        %v729 = vmul.f32 %v717, 3.8918573e-05
        %v730 = vadd.f32 %v729, 0.001143296
        %v731 = vmul.f32 %v717, %v730
        %v732 = vadd.f32 %v731, 0.014752088
        %v733 = vmul.f32 %v717, %v732
        %v734 = vadd.f32 %v733, 0.112945676
        %v735 = vmul.f32 %v717, %v734
        %v736 = vadd.f32 %v735, 0.4994258
        %v737 = vmul.f32 %v717, %v736
        %v738 = vadd.f32 %v737, 1.0
        %v739 = vrcp.pop %v738
        %v740 = vmul.f32 %v738, %v739
        %v741 = vsub.f32 1.0, %v740
        %v742 = vmul.f32 %v739, %v741
        %v743 = vadd.f32 %v739, %v742
        %vm744 = vweird.f32 %v738
        %vm745 = vweird.f32 %v739
        %vm746 = vmor %vm744, %vm745
        %v747 = vsel %vm746, %v739, %v743
        %v748 = vand.u32 2147483647, %v738
        %vm749 = vcmp.eq.f32.partialorder %v748, 8.507059e+37
        %v750 = vand.u32 %v738, 2147483648
        %v751 = vor.u32 1.1754944e-38, %v750
        %v752 = vsel %vm749, %v751, %v747
        %v753 = vmul.f32 %v728, %v752
        %v754 = vmin.f32 %v753, 1.0
        %v755 = vmax.f32 %v754, -1.0
        %v756 = vadd.f32 %v635, 1.0
        %v757 = vadd.f32 %v675, 1.0
        %v758 = vadd.f32 %v715, 1.0
        %v759 = vadd.f32 %v755, 1.0
        %v760 = vmul.f32 %v588, %v756
        %v761 = vmul.f32 %v589, %v757
        %v762 = vmul.f32 %v590, %v758
        %v763 = vmul.f32 %v591, %v759
        %v765 = vsel %vm441, %v518, 0
        %v768 = vsel %vm441, %v519, 0
        %770 = vmatpush.msra.mxu0 0.0
        %771 = vmatpush.msra.mxu0 0.0
        %772 = vmatpush.msra.mxu0 0.0
        %773 = vmatpush.msra.mxu0 0.0
        %774 = vmatpush.msra.mxu0 0.0
        %775 = vmatpush.msra.mxu0 0.0
        %776 = vmatpush.msra.mxu0 0.0
        %777 = vmatpush.msra.mxu0 0.0
        %778 = vmatpush.msra.mxu0 0.0
        %779 = vmatpush.msra.mxu0 0.0
        %780 = vmatpush.msra.mxu0 0.0
        %781 = vmatpush.msra.mxu0 0.0
        %782 = vmatpush.msra.mxu0 %v763
        %783 = vmatpush.msra.mxu0 %v762
        %784 = vmatpush.msra.mxu0 %v761
        %785 = vmatpush.msra.mxu0 %v760
        %786 = vmatmul.f32.gmra.mxu0 %v765
        %v787 = vpop.f32.mrf.mxu0
        %v788 = vadd.f32 0.0, %v787
        %789 = vmatmul.f32.gmra.mxu0 %v768
        %v790 = vpop.f32.mrf.mxu0
        %v791 = vadd.f32 0.0, %v790
        %792 = vdwg.mxu0
        %v793 = vadd.f32 %v439, %v788
        %v794 = vadd.f32 %v440, %v791
        %796 = vset.pattern.permute.xlu0 0
        %797 = vperm.xlu0 %796, %v524
        %v798 = vpop.permute.xlu0 %797
        %801 = vset.pattern.permute.xlu0 0
        %802 = vperm.xlu0 %801, %v525
        %v803 = vpop.permute.xlu0 %802
        %v805 = vadd.f32 %v793, %v798
        %v806 = vadd.f32 %v794, %v803
        %807 = vst.msk [vmem:[#allocation2] sm:$0xff] %vm441, %v805
        %808 = vst.msk [vmem:[#allocation2 + $0x8] sm:$0xff] %vm441, %v806
        %v809 = vld [vmem:[#allocation2] sm:$0xff]
        %v810 = vld [vmem:[#allocation2 + $0x8] sm:$0xff]
        %v811 = vsel %vm441, %v809, 0.0
        %812 = vadd.xlane.f32.xlu0 %v811
        %v813 = vpop.xlane.xlu0 %812
        %v814 = vsel %vm441, %v810, 0.0
        %815 = vadd.xlane.f32.xlu0 %v814
        %v816 = vpop.xlane.xlu0 %815
        %v817 = vrcp.pop 32.0
        %v818 = vmul.f32 32.0, %v817
        %v819 = vsub.f32 1.0, %v818
        %v820 = vmul.f32 %v817, %v819
        %v821 = vadd.f32 %v817, %v820
        %vm822 = vweird.f32 %v817
        %v823 = vsel %vm822, %v817, %v821
        %v824 = vmul.f32 %v813, %v823
        %v825 = vmul.f32 %v816, %v823
        %v826 = vsub.f32 %v809, %v824
        %v827 = vsub.f32 %v810, %v825
        %v828 = vmul.f32 %v826, %v826
        %v829 = vmul.f32 %v827, %v827
        %v830 = vsel %vm441, %v828, 0.0
        %831 = vadd.xlane.f32.xlu0 %v830
        %v832 = vpop.xlane.xlu0 %831
        %v833 = vsel %vm441, %v829, 0.0
        %834 = vadd.xlane.f32.xlu0 %v833
        %v835 = vpop.xlane.xlu0 %834
        %v836 = vmul.f32 %v832, %v823
        %v837 = vmul.f32 %v835, %v823
        %v838 = vadd.f32 %v836, 1e-05
        %v839 = vadd.f32 %v837, 1e-05
        %v840 = vrsqrt.pop %v838
        %v841 = vmul.f32 %v840, %v838
        %v842 = vmul.f32 %v841, %v840
        %v843 = vmul.f32 0.5, %v842
        %v844 = vsub.f32 1.5, %v843
        %v845 = vmul.f32 %v840, %v844
        %vm846 = vweird.f32 %v838
        %vm847 = vweird.f32 %v840
        %vm848 = vmor %vm846, %vm847
        %v849 = vsel %vm848, %v840, %v845
        %v850 = vrsqrt.pop %v839
        %v851 = vmul.f32 %v850, %v839
        %v852 = vmul.f32 %v851, %v850
        %v853 = vmul.f32 0.5, %v852
        %v854 = vsub.f32 1.5, %v853
        %v855 = vmul.f32 %v850, %v854
        %vm856 = vweird.f32 %v839
        %vm857 = vweird.f32 %v850
        %vm858 = vmor %vm856, %vm857
        %v859 = vsel %vm858, %v850, %v855
        %v860 = vmul.f32 %v826, %v849
        %v861 = vmul.f32 %v827, %v859
        %v862 = vld [vmem:[%s7] sm:$0x1]
        %v864 = vperm.slane %v862, 0
        %v866 = vmul.f32 %v860, %v864
        %v867 = vmul.f32 %v861, %v864
        %v868 = vld [vmem:[%s8] sm:$0x1]
        %v870 = vperm.slane %v868, 0
        %v872 = vadd.f32 %v866, %v870
        %v873 = vadd.f32 %v867, %v870
        %v874 = vld [vmem:[%s9] sm:$0xff]
        %v875 = vld [vmem:[%s9 + $0x8] sm:$0xff]
        %v876 = vld [vmem:[%s9 + $0x10] sm:$0xff]
        %v877 = vld [vmem:[%s9 + $0x18] sm:$0xff]
        %v878 = vld [vmem:[%s10] sm:$0x1]
        %v880 = vperm.slane %v878, 0
        %v883 = vsel %vm441, %v872, 0
        %v886 = vsel %vm441, %v873, 0
        %888 = vmatpush.msra.mxu0 0.0
        %889 = vmatpush.msra.mxu0 0.0
        %890 = vmatpush.msra.mxu0 0.0
        %891 = vmatpush.msra.mxu0 0.0
        %892 = vmatpush.msra.mxu0 0.0
        %893 = vmatpush.msra.mxu0 0.0
        %894 = vmatpush.msra.mxu0 0.0
        %895 = vmatpush.msra.mxu0 0.0
        %896 = vmatpush.msra.mxu0 0.0
        %897 = vmatpush.msra.mxu0 0.0
        %898 = vmatpush.msra.mxu0 0.0
        %899 = vmatpush.msra.mxu0 0.0
        %900 = vmatpush.msra.mxu0 %v877
        %901 = vmatpush.msra.mxu0 %v876
        %902 = vmatpush.msra.mxu0 %v875
        %903 = vmatpush.msra.mxu0 %v874
        %904 = vmatmul.f32.gmra.mxu0 %v883
        %v905 = vpop.f32.mrf.mxu0
        %v906 = vadd.f32 %v880, %v905
        %907 = vmatmul.f32.gmra.mxu0 %v886
        %v908 = vpop.f32.mrf.mxu0
        %v909 = vadd.f32 %v880, %v908
        %910 = vdwg.mxu0
        %v911 = vmul.f32 %v906, 0.5
        %v912 = vmul.f32 %v909, 0.5
        %v913 = vmul.f32 %v906, 0.70710677
        %v914 = vmul.f32 %v909, 0.70710677
        %v915 = vmul.f32 %v913, %v913
        %v916 = vmin.f32 16.0, %v915
        %v917 = vmul.f32 %v916, 2.1237322e-06
        %v918 = vadd.f32 %v917, 0.00028619796
        %v919 = vmul.f32 %v916, %v918
        %v920 = vadd.f32 %v919, 0.0036580483
        %v921 = vmul.f32 %v916, %v920
        %v922 = vadd.f32 %v921, 0.05243302
        %v923 = vmul.f32 %v916, %v922
        %v924 = vadd.f32 %v923, 0.18741608
        %v925 = vmul.f32 %v916, %v924
        %v926 = vadd.f32 %v925, 1.1283791
        %v927 = vmul.f32 %v913, %v926
        %v928 = vmul.f32 %v916, 3.8918573e-05
        %v929 = vadd.f32 %v928, 0.001143296
        %v930 = vmul.f32 %v916, %v929
        %v931 = vadd.f32 %v930, 0.014752088
        %v932 = vmul.f32 %v916, %v931
        %v933 = vadd.f32 %v932, 0.112945676
        %v934 = vmul.f32 %v916, %v933
        %v935 = vadd.f32 %v934, 0.4994258
        %v936 = vmul.f32 %v916, %v935
        %v937 = vadd.f32 %v936, 1.0
        %v938 = vrcp.pop %v937
        %v939 = vmul.f32 %v937, %v938
        %v940 = vsub.f32 1.0, %v939
        %v941 = vmul.f32 %v938, %v940
        %v942 = vadd.f32 %v938, %v941
        %vm943 = vweird.f32 %v937
        %vm944 = vweird.f32 %v938
        %vm945 = vmor %vm943, %vm944
        %v946 = vsel %vm945, %v938, %v942
        %v947 = vand.u32 2147483647, %v937
        %vm948 = vcmp.eq.f32.partialorder %v947, 8.507059e+37
        %v949 = vand.u32 %v937, 2147483648
        %v950 = vor.u32 1.1754944e-38, %v949
        %v951 = vsel %vm948, %v950, %v946
        %v952 = vmul.f32 %v927, %v951
        %v953 = vmin.f32 %v952, 1.0
        %v954 = vmax.f32 %v953, -1.0
        %v955 = vmul.f32 %v914, %v914
        %v956 = vmin.f32 16.0, %v955
        %v957 = vmul.f32 %v956, 2.1237322e-06
        %v958 = vadd.f32 %v957, 0.00028619796
        %v959 = vmul.f32 %v956, %v958
        %v960 = vadd.f32 %v959, 0.0036580483
        %v961 = vmul.f32 %v956, %v960
        %v962 = vadd.f32 %v961, 0.05243302
        %v963 = vmul.f32 %v956, %v962
        %v964 = vadd.f32 %v963, 0.18741608
        %v965 = vmul.f32 %v956, %v964
        %v966 = vadd.f32 %v965, 1.1283791
        %v967 = vmul.f32 %v914, %v966
        %v968 = vmul.f32 %v956, 3.8918573e-05
        %v969 = vadd.f32 %v968, 0.001143296
        %v970 = vmul.f32 %v956, %v969
        %v971 = vadd.f32 %v970, 0.014752088
        %v972 = vmul.f32 %v956, %v971
        %v973 = vadd.f32 %v972, 0.112945676
        %v974 = vmul.f32 %v956, %v973
        %v975 = vadd.f32 %v974, 0.4994258
        %v976 = vmul.f32 %v956, %v975
        %v977 = vadd.f32 %v976, 1.0
        %v978 = vrcp.pop %v977
        %v979 = vmul.f32 %v977, %v978
        %v980 = vsub.f32 1.0, %v979
        %v981 = vmul.f32 %v978, %v980
        %v982 = vadd.f32 %v978, %v981
        %vm983 = vweird.f32 %v977
        %vm984 = vweird.f32 %v978
        %vm985 = vmor %vm983, %vm984
        %v986 = vsel %vm985, %v978, %v982
        %v987 = vand.u32 2147483647, %v977
        %vm988 = vcmp.eq.f32.partialorder %v987, 8.507059e+37
        %v989 = vand.u32 %v977, 2147483648
        %v990 = vor.u32 1.1754944e-38, %v989
        %v991 = vsel %vm988, %v990, %v986
        %v992 = vmul.f32 %v967, %v991
        %v993 = vmin.f32 %v992, 1.0
        %v994 = vmax.f32 %v993, -1.0
        %v995 = vadd.f32 %v954, 1.0
        %v996 = vadd.f32 %v994, 1.0
        %v997 = vmul.f32 %v911, %v995
        %v998 = vmul.f32 %v912, %v996
        %v999 = vld [vmem:[%s11] sm:$0xff]
        %v1000 = vld [vmem:[%s11 + $0x8] sm:$0xff]
        %v1001 = vld [vmem:[%s11 + $0x10] sm:$0xff]
        %v1002 = vld [vmem:[%s11 + $0x18] sm:$0xff]
        %v1003 = vld [vmem:[%s11 + $0x20] sm:$0xff]
        %v1004 = vld [vmem:[%s11 + $0x28] sm:$0xff]
        %v1005 = vld [vmem:[%s11 + $0x30] sm:$0xff]
        %v1006 = vld [vmem:[%s11 + $0x38] sm:$0xff]
        %v1007 = vld [vmem:[%s12] sm:$0x1]
        %v1009 = vperm.slane %v1007, 0
        %vm1011 = vcmask 523264
        %v1013 = vsel %vm1011, %v997, 0
        %v1016 = vsel %vm1011, %v998, 0
        %1018 = vmatpush.msra.mxu0 0.0
        %1019 = vmatpush.msra.mxu0 0.0
        %1020 = vmatpush.msra.mxu0 0.0
        %1021 = vmatpush.msra.mxu0 0.0
        %1022 = vmatpush.msra.mxu0 0.0
        %1023 = vmatpush.msra.mxu0 0.0
        %1024 = vmatpush.msra.mxu0 0.0
        %1025 = vmatpush.msra.mxu0 0.0
        %1026 = vmatpush.msra.mxu0 %v1006
        %1027 = vmatpush.msra.mxu0 %v1005
        %1028 = vmatpush.msra.mxu0 %v1004
        %1029 = vmatpush.msra.mxu0 %v1003
        %1030 = vmatpush.msra.mxu0 %v1002
        %1031 = vmatpush.msra.mxu0 %v1001
        %1032 = vmatpush.msra.mxu0 %v1000
        %1033 = vmatpush.msra.mxu0 %v999
        %1034 = vmatmul.f32.gmra.mxu0 %v1013
        %v1035 = vpop.f32.mrf.mxu0
        %v1036 = vadd.f32 %v1009, %v1035
        %1037 = vmatmul.f32.gmra.mxu0 %v1016
        %v1038 = vpop.f32.mrf.mxu0
        %v1039 = vadd.f32 %v1009, %v1038
        %1040 = vdwg.mxu0
        %v1041 = vadd.f32 %v809, %v1036
        %v1042 = vadd.f32 %v810, %v1039
        %1043 = vst.msk [vmem:[%s433] sm:$0xff] %vm441, %v1041
        %1044 = vst.msk [vmem:[%s433 + $0x8] sm:$0xff] %vm441, %v1042
        %s1045 = sand.u32 %s313, 1
        %s1046 = scalar_lea.sflag [#allocation4], %s1045
        %s1047 = sand.u32 %s313, 1
        %s1048 = smul.addr %s1047, 16
        %s1049 = scalar_lea.vmem [#allocation3], %s1048
        // Predicated region
        $region73: #{mixer_block_forward.1} parent=71 // pred_check
          %p1050 = pneg %p323
        $region74: #{mixer_block_forward.1} parent=71 // pred_check_branch
          %1052 = sbr.rel (%p1050) target = $region76
        $region75: #{mixer_block_forward.1} parent=71 // pred_region
          %1054 = vsyncadd %s1046, 0
          %s1055 = smul.addr %s27, 2
          %s1056 = smul.addr %s1055, 8
          %s1057 = scalar_lea.hbm %s13, %s1056
          %s1058 = sshll.u32 %s1049, 4
          %s1059 = int_to_ptr.vmem [resolvable:$true] %s1058
          %s1060 = sshll.u32 %s1057, 4
          %s1061 = int_to_ptr.hbm [resolvable:$true] %s1060
          %1066 = dma.vmem_to_hbm [thread:$0]  %s1059, 256, %s1061, %s1046, 128, 128, 8
        $region76: #{mixer_block_forward.1} parent=71 // pred_fallthru
          _
      $region72: #{mixer_block_forward.1} parent=5 // pred_fallthru
        _
      %p1067 = scmp.le.s32.totalorder 2, %s22
      // Predicated region
      $region77: #{mixer_block_forward.1} parent=5 // pred_check
        %p1068 = pneg %p1067
      $region78: #{mixer_block_forward.1} parent=5 // pred_check_branch
        %1070 = sbr.rel (%p1068) target = $region80
      $region79: #{mixer_block_forward.1} parent=5 // pred_region
        %s1071 = ssub.s32 %s22, 2
        // Predicated region
        $region81: #{mixer_block_forward.1} parent=79 // pred_check
          %p1072 = pneg %p329
        $region82: #{mixer_block_forward.1} parent=79 // pred_check_branch
          %1074 = sbr.rel (%p1072) target = $region84
        $region83: #{mixer_block_forward.1} parent=79 // pred_region
          %s1075 = sand.u32 %s314, 1
          %s1076 = scalar_lea.sflag [#allocation4], %s1075
          %s1077 = sand.u32 %s314, 1
          %s1078 = smul.addr %s1077, 16
          %s1079 = scalar_lea.vmem [#allocation3], %s1078
          %1081 = dma.done %s1076, 256
        $region84: #{mixer_block_forward.1} parent=79 // pred_fallthru
          _
      $region80: #{mixer_block_forward.1} parent=5 // pred_fallthru
        _
    $region6: #{mixer_block_forward.1} parent=1 // loop_footer
      %s26 = sadd.s32 1, %s22
    $region7: #{mixer_block_forward.1} parent=1 // loop_footer_branch
      %21 = sbr.rel target = $region3
    $region8: #{mixer_block_forward.1} parent=1 // loop_exit
      _
    %1082 = vsyncpa [#allocation4], 1
    %s1083 = scalar_lea.sflag [#allocation4], 1
    %1084 = vsyncpa %s1083, 1

</llo_original>
